<compile_context>
chip_gen: v6e
topology: v6e:2x2x1
jax: 0.10.0
libtpu: 0.0.40
codegen_flags: <defaults>
</compile_context>

<pallas_src>
import jax
import jax.numpy as jnp
from jax.experimental import pallas as pl
from jax.experimental.pallas import tpu as pltpu


LOSS_LIST = ("CE", "Superior", "Revisit")

_BLOCK_BYTES = 1 << 20                 # ~1 MiB per streamed input block
_VMEM_LIMIT_BYTES = 32 * 1024 * 1024   # scoped VMEM request, safe on v5e/v6e/v7x


# ----------------------------- layout helpers --------------------------------

def _lane_dense_2d(x):
    """Row-major 2D view of x with a lane-dense (multiple-of-128) last dim if possible."""
    s = int(x.size)
    for width in (2048, 1024, 512, 256, 128):
        if s % width == 0:
            return x.reshape(s // width, width)
    if x.ndim >= 3:
        return x.reshape(-1, x.shape[-2] * x.shape[-1])
    if x.ndim == 2:
        return x
    return x.reshape(1, s)


def _pick_row_block(rows, cols, dtype, block_bytes):
    """Row-block size: multiple of 8 (or the full row count) within the byte budget."""
    budget = max(1, block_bytes // jnp.dtype(dtype).itemsize)
    if rows * cols <= budget or rows <= 8:
        return int(rows)
    rb = (budget // cols) // 8 * 8
    return int(max(8, min(rb, rows)))


# ----------------------------- fused loss kernel ------------------------------

def _build_loss_kernel(batch, ce_coeff, superior, attn_meta, grid):
    """attn_meta[t] = (n_blocks, row_block, rows, inv_size) for attention tensor t."""
    n_attn = len(attn_meta)

    def kernel(*refs):
        logits_ref, labels_ref, cls1_ref = refs[0], refs[1], refs[2]
        attn_refs = refs[3:3 + n_attn]
        out_ref = refs[3 + n_attn]
        acc_refs = refs[4 + n_attn:]

        i = pl.program_id(0)

        # ---- init per-tensor accumulators ----
        if n_attn:
            @pl.when(i == 0)
            def _init():
                for acc in acc_refs:
                    acc[...] = jnp.zeros_like(acc)

        # ---- streaming partial sums (one VMEM row-vector accumulator per tensor) ----
        for t in range(n_attn):
            n_blocks, row_block, rows, _ = attn_meta[t]
            x_ref = attn_refs[t]
            acc = acc_refs[t]

            def _accumulate(x_ref=x_ref, acc=acc, row_block=row_block, rows=rows):
                x = x_ref[...].astype(jnp.float32)
                if rows % row_block != 0:
                    # Mask padded rows of the partial trailing block.
                    rid = i * row_block + jax.lax.broadcasted_iota(
                        jnp.int32, x.shape, 0)
                    x = jnp.where(rid < rows, x, 0.0)
                acc[...] += jnp.sum(x, axis=0, keepdims=True)

            if n_blocks == grid:
                _accumulate()
            elif n_blocks == 1:
                pl.when(i == 0)(_accumulate)
            else:
                pl.when(i < n_blocks)(_accumulate)

        # ---- finalize: cross-entropy + combine every term into the scalar loss ----
        @pl.when(i == grid - 1)
        def _finalize():
            loss = jnp.zeros((1, 1), jnp.float32)

            if ce_coeff:
                logits = logits_ref[...].astype(jnp.float32)             # [N, C]
                labels = labels_ref[...]                                 # [N, 1] int32
                m = jnp.max(logits, axis=-1, keepdims=True)
                shifted = logits - m
                lse = jnp.log(jnp.sum(jnp.exp(shifted), axis=-1, keepdims=True))
                col = jax.lax.broadcasted_iota(jnp.int32, logits.shape, 1)
                # Target logit via compare+select (no f32 one-hot materialization).
                tgt = jnp.sum(jnp.where(col == labels, shifted, 0.0),
                              axis=-1, keepdims=True)                    # [N, 1]
                ce = jnp.sum(lse - tgt, axis=0, keepdims=True) * (1.0 / batch)
                loss = loss + float(ce_coeff) * ce
                if superior:
                    loss = loss - cls1_ref[...].astype(jnp.float32)

            for t in range(n_attn):
                inv_size = attn_meta[t][3]
                mean_t = jnp.sum(acc_refs[t][...], keepdims=True) * inv_size
                loss = loss + (1.0 - mean_t)

            out_ref[...] = loss

    return kernel


# ----------------------------- public wrapper --------------------------------

def attn_loss_forward(output, label, loss_cls1, attn_features=None,
                      loss_list=LOSS_LIST, block_bytes=_BLOCK_BYTES):
    """JAX/Pallas equivalent of attn_loss.forward (single fused pallas_call)."""
    ce_coeff = int("CE" in loss_list) + int("Superior" in loss_list)
    superior = "Superior" in loss_list

    # Every Revisit term (channel or spatial) equals 1 - global_mean(x) exactly.
    attn_tensors = []
    if attn_features is not None and "Revisit" in loss_list:
        for attn in attn_features:
            if attn[0] is not None:
                attn_tensors.append(jnp.asarray(attn[0]))
            if attn[1] is not None:
                attn_tensors.append(jnp.asarray(attn[1]))

    if ce_coeff == 0 and not attn_tensors:
        return jnp.float32(0.0)

    output = jnp.asarray(output)
    batch, n_classes = int(output.shape[0]), int(output.shape[1])
    labels2d = jnp.asarray(label).astype(jnp.int32).reshape(batch, 1)
    cls1 = jnp.asarray(loss_cls1, dtype=jnp.float32).reshape(1, 1)

    views, metas = [], []
    for x in attn_tensors:
        v = _lane_dense_2d(x)
        rows, cols = int(v.shape[0]), int(v.shape[1])
        rb = _pick_row_block(rows, cols, v.dtype, block_bytes)
        n_blocks = -(-rows // rb)  # ceil div
        views.append(v)
        metas.append((int(n_blocks), int(rb), int(rows), 1.0 / float(x.size)))

    grid = max([1] + [m[0] for m in metas])

    def _const_map(i):
        return (0, 0)

    def _attn_map(n_blocks):
        if n_blocks == grid:
            return lambda i: (i, 0)
        if n_blocks == 1:
            return _const_map
        return lambda i, n=n_blocks: (jnp.minimum(i, n - 1), 0)

    in_specs = [
        pl.BlockSpec((batch, n_classes), _const_map),   # logits   (resident)
        pl.BlockSpec((batch, 1), _const_map),           # labels   (resident)
        pl.BlockSpec((1, 1), _const_map),               # loss_cls1 (resident)
    ] + [
        pl.BlockSpec((m[1], int(v.shape[1])), _attn_map(m[0]))
        for v, m in zip(views, metas)
    ]

    scratch_shapes = [pltpu.VMEM((1, int(v.shape[1])), jnp.float32) for v in views]

    kernel = _build_loss_kernel(batch, ce_coeff, superior, metas, grid)

    out = pl.pallas_call(
        kernel,
        out_shape=jax.ShapeDtypeStruct((1, 1), jnp.float32),
        grid_spec=pltpu.PrefetchScalarGridSpec(
            num_scalar_prefetch=0,
            grid=(grid,),
            in_specs=in_specs,
            out_specs=pl.BlockSpec((1, 1), _const_map),
            scratch_shapes=scratch_shapes,
        ),
        compiler_params=pltpu.CompilerParams(
            dimension_semantics=("arbitrary",),
            vmem_limit_bytes=_VMEM_LIMIT_BYTES,
        ),
    )(output, labels2d, cls1, *views)

    return out[0, 0]


# ----------------------------- reference (pure JAX) ---------------------------

def _reference_loss(output, label, loss_cls1, attn_features, loss_list=LOSS_LIST):
    logp = jax.nn.log_softmax(jnp.asarray(output, jnp.float32), axis=-1)
    lbl = jnp.asarray(label).astype(jnp.int32).reshape(-1, 1)
    ce = -jnp.mean(jnp.take_along_axis(logp, lbl, axis=-1))
    loss = jnp.float32(0.0)
    if "CE" in loss_list:
        loss = loss + ce
    if "Superior" in loss_list:
        loss = loss + ce - jnp.float32(loss_cls1)
    if attn_features is not None and "Revisit" in loss_list:
        for attn in attn_features:
            if attn[0] is not None:
                loss = loss + jnp.mean(1.0 - jnp.mean(attn[0], axis=(2, 3)))
            if attn[1] is not None:
                loss = loss + jnp.mean(1.0 - jnp.mean(attn[1], axis=1))
    return loss


# ----------------------------- demo / smoke test ------------------------------

if __name__ == "__main__":
    key = jax.random.PRNGKey(0)
    keys = jax.random.split(key, 8)

    batch, num_classes = 2, 8
    logits = jax.random.normal(keys[0], (batch, num_classes), dtype=jnp.float32)
    labels = jax.random.randint(keys[1], (batch,), 0, num_classes, dtype=jnp.int32)
    loss_cls1 = 0.5
    sig = jax.nn.sigmoid

    # Check 1: small NCHW attention maps (single-block fast path), with a None slot.
    attn_small = [
        (sig(jax.random.normal(keys[2], (2, 4, 16, 16), jnp.float32)),
         sig(jax.random.normal(keys[3], (2, 4, 16, 16), jnp.float32))),
        (sig(jax.random.normal(keys[4], (2, 4, 16, 16), jnp.float32)), None),
    ]
    got = jax.block_until_ready(attn_loss_forward(logits, labels, loss_cls1, attn_small))
    want = _reference_loss(logits, labels, loss_cls1, attn_small)
    assert jnp.isfinite(got)
    assert jnp.allclose(got, want, rtol=1e-5, atol=1e-5), (got, want)

    # Check 2: heterogeneous shapes + tiny block budget to exercise the gridded,
    # masked, clamped-index streaming path (grid > 1, partial trailing blocks).
    attn_mixed = [
        (sig(jax.random.normal(keys[5], (2, 8, 24, 24), jnp.float32)),     # 2 row blocks
         sig(jax.random.normal(keys[6], (1, 17, 32, 32), jnp.float32))),   # 3 row blocks
        (sig(jax.random.normal(keys[7], (2, 4, 16, 16), jnp.float32)), None),  # 1 block
    ]
    got2 = jax.block_until_ready(
        attn_loss_forward(logits, labels, loss_cls1, attn_mixed, block_bytes=8 * 1024))
    want2 = _reference_loss(logits, labels, loss_cls1, attn_mixed)
    assert jnp.allclose(got2, want2, rtol=1e-5, atol=1e-5), (got2, want2)

    # Check 3: no attention features at all (CE + Superior only).
    got3 = jax.block_until_ready(attn_loss_forward(logits, labels, loss_cls1, None))
    want3 = _reference_loss(logits, labels, loss_cls1, None)
    assert jnp.allclose(got3, want3, rtol=1e-5, atol=1e-5), (got3, want3)

    print("KERNEL_OK")
</pallas_src>

<mosaic_0001>
module attributes {stable_mosaic.version = 11 : i64} {
  func.func @kernel(%arg0: i32, %arg1: memref<2x8xf32, #tpu.memory_space<vmem>>, %arg2: memref<2x1xi32, #tpu.memory_space<vmem>>, %arg3: memref<1x1xf32, #tpu.memory_space<vmem>>, %arg4: memref<1x2048xf32, #tpu.memory_space<vmem>>, %arg5: memref<1x2048xf32, #tpu.memory_space<vmem>>, %arg6: memref<1x2048xf32, #tpu.memory_space<vmem>>, %arg7: memref<1x1xf32, #tpu.memory_space<vmem>>, %arg8: memref<1x2048xf32, #tpu.memory_space<vmem>>, %arg9: memref<1x2048xf32, #tpu.memory_space<vmem>>, %arg10: memref<1x2048xf32, #tpu.memory_space<vmem>>) attributes {dimension_semantics = [#tpu.dimension_semantics<arbitrary>], iteration_bounds = array<i64: 1>, scalar_prefetch = 0 : i64, scratch_operands = 3 : i64, tpu.core_type = #tpu.core_type<tc>, window_params = [{pipeline_mode = #tpu.pipeline_mode<synchronous>, transform_indices = @transform_0, window_bounds = array<i64: 2, 8>}, {pipeline_mode = #tpu.pipeline_mode<synchronous>, transform_indices = @transform_1, window_bounds = array<i64: 2, 1>}, {pipeline_mode = #tpu.pipeline_mode<synchronous>, transform_indices = @transform_2, window_bounds = array<i64: 1, 1>}, {transform_indices = @transform_3, window_bounds = array<i64: 1, 2048>}, {transform_indices = @transform_4, window_bounds = array<i64: 1, 2048>}, {transform_indices = @transform_5, window_bounds = array<i64: 1, 2048>}, {pipeline_mode = #tpu.pipeline_mode<synchronous>, transform_indices = @transform_6, window_bounds = array<i64: 1, 1>}]} {
    %c0_i32 = arith.constant 0 : i32
    %0 = arith.cmpi eq, %arg0, %c0_i32 : i32
    %1 = arith.extui %0 : i1 to i32
    %c0_i32_0 = arith.constant 0 : i32
    %2 = arith.cmpi ne, %1, %c0_i32_0 : i32
    scf.if %2 {
      %cst_22 = arith.constant 0.000000e+00 : f32
      %24 = vector.broadcast %cst_22 : f32 to vector<1x2048xf32>
      %c0_23 = arith.constant 0 : index
      %c0_24 = arith.constant 0 : index
      %25 = vector.load %arg8[%c0_23, %c0_24] : memref<1x2048xf32, #tpu.memory_space<vmem>>, vector<1x2048xf32>
      tpu.vector_store %arg8[%c0_23, %c0_24], %24 {strides = array<i32>} : memref<1x2048xf32, #tpu.memory_space<vmem>>, vector<1x2048xf32>,
      %cst_25 = arith.constant 0.000000e+00 : f32
      %26 = vector.broadcast %cst_25 : f32 to vector<1x2048xf32>
      %c0_26 = arith.constant 0 : index
      %c0_27 = arith.constant 0 : index
      %27 = vector.load %arg9[%c0_26, %c0_27] : memref<1x2048xf32, #tpu.memory_space<vmem>>, vector<1x2048xf32>
      tpu.vector_store %arg9[%c0_26, %c0_27], %26 {strides = array<i32>} : memref<1x2048xf32, #tpu.memory_space<vmem>>, vector<1x2048xf32>,
      %cst_28 = arith.constant 0.000000e+00 : f32
      %28 = vector.broadcast %cst_28 : f32 to vector<1x2048xf32>
      %c0_29 = arith.constant 0 : index
      %c0_30 = arith.constant 0 : index
      %29 = vector.load %arg10[%c0_29, %c0_30] : memref<1x2048xf32, #tpu.memory_space<vmem>>, vector<1x2048xf32>
      tpu.vector_store %arg10[%c0_29, %c0_30], %28 {strides = array<i32>} : memref<1x2048xf32, #tpu.memory_space<vmem>>, vector<1x2048xf32>,
    } else {
    }
    %c0 = arith.constant 0 : index
    %c0_1 = arith.constant 0 : index
    %3 = vector.load %arg4[%c0, %c0_1] : memref<1x2048xf32, #tpu.memory_space<vmem>>, vector<1x2048xf32>
    %c0_2 = arith.constant 0 : index
    %c0_3 = arith.constant 0 : index
    %4 = vector.load %arg8[%c0_2, %c0_3] : memref<1x2048xf32, #tpu.memory_space<vmem>>, vector<1x2048xf32>
    %cst = arith.constant dense<0.000000e+00> : vector<2048xf32>
    %5 = vector.multi_reduction <add>, %3, %cst [0] : vector<1x2048xf32> to vector<2048xf32>
    %6 = vector.shape_cast %5 : vector<2048xf32> to vector<1x2048xf32>
    %7 = arith.addf %4, %6 : vector<1x2048xf32>
    %c0_4 = arith.constant 0 : index
    %c0_5 = arith.constant 0 : index
    %8 = vector.load %arg8[%c0_4, %c0_5] : memref<1x2048xf32, #tpu.memory_space<vmem>>, vector<1x2048xf32>
    tpu.vector_store %arg8[%c0_4, %c0_5], %7 {strides = array<i32>} : memref<1x2048xf32, #tpu.memory_space<vmem>>, vector<1x2048xf32>,
    %c0_6 = arith.constant 0 : index
    %c0_7 = arith.constant 0 : index
    %9 = vector.load %arg5[%c0_6, %c0_7] : memref<1x2048xf32, #tpu.memory_space<vmem>>, vector<1x2048xf32>
    %c0_8 = arith.constant 0 : index
    %c0_9 = arith.constant 0 : index
    %10 = vector.load %arg9[%c0_8, %c0_9] : memref<1x2048xf32, #tpu.memory_space<vmem>>, vector<1x2048xf32>
    %cst_10 = arith.constant dense<0.000000e+00> : vector<2048xf32>
    %11 = vector.multi_reduction <add>, %9, %cst_10 [0] : vector<1x2048xf32> to vector<2048xf32>
    %12 = vector.shape_cast %11 : vector<2048xf32> to vector<1x2048xf32>
    %13 = arith.addf %10, %12 : vector<1x2048xf32>
    %c0_11 = arith.constant 0 : index
    %c0_12 = arith.constant 0 : index
    %14 = vector.load %arg9[%c0_11, %c0_12] : memref<1x2048xf32, #tpu.memory_space<vmem>>, vector<1x2048xf32>
    tpu.vector_store %arg9[%c0_11, %c0_12], %13 {strides = array<i32>} : memref<1x2048xf32, #tpu.memory_space<vmem>>, vector<1x2048xf32>,
    %c0_13 = arith.constant 0 : index
    %c0_14 = arith.constant 0 : index
    %15 = vector.load %arg6[%c0_13, %c0_14] : memref<1x2048xf32, #tpu.memory_space<vmem>>, vector<1x2048xf32>
    %c0_15 = arith.constant 0 : index
    %c0_16 = arith.constant 0 : index
    %16 = vector.load %arg10[%c0_15, %c0_16] : memref<1x2048xf32, #tpu.memory_space<vmem>>, vector<1x2048xf32>
    %cst_17 = arith.constant dense<0.000000e+00> : vector<2048xf32>
    %17 = vector.multi_reduction <add>, %15, %cst_17 [0] : vector<1x2048xf32> to vector<2048xf32>
    %18 = vector.shape_cast %17 : vector<2048xf32> to vector<1x2048xf32>
    %19 = arith.addf %16, %18 : vector<1x2048xf32>
    %c0_18 = arith.constant 0 : index
    %c0_19 = arith.constant 0 : index
    %20 = vector.load %arg10[%c0_18, %c0_19] : memref<1x2048xf32, #tpu.memory_space<vmem>>, vector<1x2048xf32>
    tpu.vector_store %arg10[%c0_18, %c0_19], %19 {strides = array<i32>} : memref<1x2048xf32, #tpu.memory_space<vmem>>, vector<1x2048xf32>,
    %c0_i32_20 = arith.constant 0 : i32
    %21 = arith.cmpi eq, %arg0, %c0_i32_20 : i32
    %22 = arith.extui %21 : i1 to i32
    %c0_i32_21 = arith.constant 0 : i32
    %23 = arith.cmpi ne, %22, %c0_i32_21 : i32
    scf.if %23 {
      %cst_22 = arith.constant 0.000000e+00 : f32
      %24 = vector.broadcast %cst_22 : f32 to vector<1x1xf32>
      %c0_23 = arith.constant 0 : index
      %c0_24 = arith.constant 0 : index
      %25 = vector.load %arg1[%c0_23, %c0_24] : memref<2x8xf32, #tpu.memory_space<vmem>>, vector<2x8xf32>
      %c0_25 = arith.constant 0 : index
      %c0_26 = arith.constant 0 : index
      %26 = vector.load %arg2[%c0_25, %c0_26] : memref<2x1xi32, #tpu.memory_space<vmem>>, vector<2x1xi32>
      %cst_27 = arith.constant dense<0xFF800000> : vector<2xf32>
      %27 = vector.multi_reduction <maximumf>, %25, %cst_27 [1] : vector<2x8xf32> to vector<2xf32>
      %28 = vector.shape_cast %27 : vector<2xf32> to vector<2x1xf32>
      %29 = vector.broadcast %28 : vector<2x1xf32> to vector<2x8xf32>
      %30 = arith.subf %25, %29 : vector<2x8xf32>
      %31 = math.exp %30 : vector<2x8xf32>
      %cst_28 = arith.constant dense<0.000000e+00> : vector<2xf32>
      %32 = vector.multi_reduction <add>, %31, %cst_28 [1] : vector<2x8xf32> to vector<2xf32>
      %33 = vector.shape_cast %32 : vector<2xf32> to vector<2x1xf32>
      %34 = math.log %33 : vector<2x1xf32>
      %35 = tpu.iota {dimensions = array<i32: 1>} : vector<2x8xi32>
      %36 = vector.broadcast %26 : vector<2x1xi32> to vector<2x8xi32>
      %37 = arith.cmpi eq, %35, %36 : vector<2x8xi32>
      %cst_29 = arith.constant 0.000000e+00 : f32
      %38 = vector.broadcast %cst_29 : f32 to vector<2x8xf32>
      %39 = arith.select %37, %30, %38 : vector<2x8xi1>, vector<2x8xf32>
      %cst_30 = arith.constant dense<0.000000e+00> : vector<2xf32>
      %40 = vector.multi_reduction <add>, %39, %cst_30 [1] : vector<2x8xf32> to vector<2xf32>
      %41 = vector.shape_cast %40 : vector<2xf32> to vector<2x1xf32>
      %42 = arith.subf %34, %41 : vector<2x1xf32>
      %cst_31 = arith.constant dense<0.000000e+00> : vector<1xf32>
      %43 = vector.multi_reduction <add>, %42, %cst_31 [0] : vector<2x1xf32> to vector<1xf32>
      %44 = vector.shape_cast %43 : vector<1xf32> to vector<1x1xf32>
      %cst_32 = arith.constant 5.000000e-01 : f32
      %45 = vector.broadcast %cst_32 : f32 to vector<1x1xf32>
      %46 = arith.mulf %44, %45 : vector<1x1xf32>
      %cst_33 = arith.constant 2.000000e+00 : f32
      %47 = vector.broadcast %cst_33 : f32 to vector<1x1xf32>
      %48 = arith.mulf %47, %46 : vector<1x1xf32>
      %49 = arith.addf %24, %48 : vector<1x1xf32>
      %c0_34 = arith.constant 0 : index
      %c0_35 = arith.constant 0 : index
      %50 = vector.load %arg3[%c0_34, %c0_35] : memref<1x1xf32, #tpu.memory_space<vmem>>, vector<1x1xf32>
      %51 = arith.subf %49, %50 : vector<1x1xf32>
      %c0_36 = arith.constant 0 : index
      %c0_37 = arith.constant 0 : index
      %52 = vector.load %arg8[%c0_36, %c0_37] : memref<1x2048xf32, #tpu.memory_space<vmem>>, vector<1x2048xf32>
      %53 = vector.shape_cast %52 : vector<1x2048xf32> to vector<1x1x2048xf32>
      %cst_38 = arith.constant dense<0.000000e+00> : vector<1xf32>
      %54 = vector.multi_reduction <add>, %53, %cst_38 [1, 2] : vector<1x1x2048xf32> to vector<1xf32>
      %55 = vector.shape_cast %54 : vector<1xf32> to vector<1x1x1xf32>
      %56 = vector.extract %55[0, 0, 0] : f32 from vector<1x1x1xf32>
      %57 = vector.broadcast %56 : f32 to vector<1x1xf32>
      %cst_39 = arith.constant 4.8828125E-4 : f32
      %58 = vector.broadcast %cst_39 : f32 to vector<1x1xf32>
      %59 = arith.mulf %57, %58 : vector<1x1xf32>
      %cst_40 = arith.constant 1.000000e+00 : f32
      %60 = vector.broadcast %cst_40 : f32 to vector<1x1xf32>
      %61 = arith.subf %60, %59 : vector<1x1xf32>
      %62 = arith.addf %51, %61 : vector<1x1xf32>
      %c0_41 = arith.constant 0 : index
      %c0_42 = arith.constant 0 : index
      %63 = vector.load %arg9[%c0_41, %c0_42] : memref<1x2048xf32, #tpu.memory_space<vmem>>, vector<1x2048xf32>
      %64 = vector.shape_cast %63 : vector<1x2048xf32> to vector<1x1x2048xf32>
      %cst_43 = arith.constant dense<0.000000e+00> : vector<1xf32>
      %65 = vector.multi_reduction <add>, %64, %cst_43 [1, 2] : vector<1x1x2048xf32> to vector<1xf32>
      %66 = vector.shape_cast %65 : vector<1xf32> to vector<1x1x1xf32>
      %67 = vector.extract %66[0, 0, 0] : f32 from vector<1x1x1xf32>
      %68 = vector.broadcast %67 : f32 to vector<1x1xf32>
      %cst_44 = arith.constant 4.8828125E-4 : f32
      %69 = vector.broadcast %cst_44 : f32 to vector<1x1xf32>
      %70 = arith.mulf %68, %69 : vector<1x1xf32>
      %cst_45 = arith.constant 1.000000e+00 : f32
      %71 = vector.broadcast %cst_45 : f32 to vector<1x1xf32>
      %72 = arith.subf %71, %70 : vector<1x1xf32>
      %73 = arith.addf %62, %72 : vector<1x1xf32>
      %c0_46 = arith.constant 0 : index
      %c0_47 = arith.constant 0 : index
      %74 = vector.load %arg10[%c0_46, %c0_47] : memref<1x2048xf32, #tpu.memory_space<vmem>>, vector<1x2048xf32>
      %75 = vector.shape_cast %74 : vector<1x2048xf32> to vector<1x1x2048xf32>
      %cst_48 = arith.constant dense<0.000000e+00> : vector<1xf32>
      %76 = vector.multi_reduction <add>, %75, %cst_48 [1, 2] : vector<1x1x2048xf32> to vector<1xf32>
      %77 = vector.shape_cast %76 : vector<1xf32> to vector<1x1x1xf32>
      %78 = vector.extract %77[0, 0, 0] : f32 from vector<1x1x1xf32>
      %79 = vector.broadcast %78 : f32 to vector<1x1xf32>
      %cst_49 = arith.constant 4.8828125E-4 : f32
      %80 = vector.broadcast %cst_49 : f32 to vector<1x1xf32>
      %81 = arith.mulf %79, %80 : vector<1x1xf32>
      %cst_50 = arith.constant 1.000000e+00 : f32
      %82 = vector.broadcast %cst_50 : f32 to vector<1x1xf32>
      %83 = arith.subf %82, %81 : vector<1x1xf32>
      %84 = arith.addf %73, %83 : vector<1x1xf32>
      %c0_51 = arith.constant 0 : index
      %c0_52 = arith.constant 0 : index
      %85 = vector.load %arg7[%c0_51, %c0_52] : memref<1x1xf32, #tpu.memory_space<vmem>>, vector<1x1xf32>
      tpu.vector_store %arg7[%c0_51, %c0_52], %84 {strides = array<i32>} : memref<1x1xf32, #tpu.memory_space<vmem>>, vector<1x1xf32>,
    } else {
    }
    return
  }
  func.func @transform_0(%arg0: i32) -> (i32, i32) {
    %c0_i32 = arith.constant 0 : i32
    %c0_i32_0 = arith.constant 0 : i32
    %c0_i32_1 = arith.constant 0 : i32
    return %c0_i32, %c0_i32_0 : i32, i32
  }
  func.func @transform_1(%arg0: i32) -> (i32, i32) {
    %c0_i32 = arith.constant 0 : i32
    %c0_i32_0 = arith.constant 0 : i32
    %c0_i32_1 = arith.constant 0 : i32
    return %c0_i32, %c0_i32_0 : i32, i32
  }
  func.func @transform_2(%arg0: i32) -> (i32, i32) {
    %c0_i32 = arith.constant 0 : i32
    %c0_i32_0 = arith.constant 0 : i32
    %c0_i32_1 = arith.constant 0 : i32
    return %c0_i32, %c0_i32_0 : i32, i32
  }
  func.func @transform_3(%arg0: i32) -> (i32, i32) {
    %c0_i32 = arith.constant 0 : i32
    %c0_i32_0 = arith.constant 0 : i32
    return %arg0, %c0_i32 : i32, i32
  }
  func.func @transform_4(%arg0: i32) -> (i32, i32) {
    %c0_i32 = arith.constant 0 : i32
    %c0_i32_0 = arith.constant 0 : i32
    return %arg0, %c0_i32 : i32, i32
  }
  func.func @transform_5(%arg0: i32) -> (i32, i32) {
    %c0_i32 = arith.constant 0 : i32
    %c0_i32_0 = arith.constant 0 : i32
    return %arg0, %c0_i32 : i32, i32
  }
  func.func @transform_6(%arg0: i32) -> (i32, i32) {
    %c0_i32 = arith.constant 0 : i32
    %c0_i32_0 = arith.constant 0 : i32
    %c0_i32_1 = arith.constant 0 : i32
    return %c0_i32, %c0_i32_0 : i32, i32
  }
}

</mosaic_0001>

<llo_original>
// kernel: tpu_custom_call.1
$region0: #{tpu_custom_call.1}
  #allocation0 [shape = 'u32[]', space=smem, size = 0x4, offset = 0x4, fixed_abs, tag = 'smem constant byte address 0x4 - core index']
  #allocation1 [shape = 'u32[144,128]{1,0:T(1,128)}', space=vmem, size = 0x12000, scoped, tag = 'internal scratch']
  #allocation2 [shape = 'f32[1,2048]{1,0:T(1,128)}', space=vmem, size = 0x2000, scoped, tag = 'scratch operand']
  #allocation3 [shape = 'f32[1,2048]{1,0:T(1,128)}', space=vmem, size = 0x2000, scoped, tag = 'scratch operand']
  #allocation4 [shape = 'f32[1,2048]{1,0:T(1,128)}', space=vmem, size = 0x2000, scoped, tag = 'scratch operand']
  #allocation5 [shape = 'f32[1,1]{1,0:T(1,128)S(1)}', space=vmem, size = 0x200, scoped, tag = 'scoped memory for tpu_custom_call.1']
  %s0 = inlined_call_operand.vmem [shape: f32[2,8], index: 0, kind: input, shape index: {}]
  %s1 = inlined_call_operand.vmem [shape: s32[2,1], index: 1, kind: input, shape index: {}]
  %s2 = inlined_call_operand.<no memory space> [shape: f32[1,1], index: 2, kind: input, shape index: {}]
  %s3 = inlined_call_operand.hbm [shape: f32[1,2048], index: 3, kind: input, shape index: {}]
  %s4 = inlined_call_operand.hbm [shape: f32[1,2048], index: 4, kind: input, shape index: {}]
  %s5 = inlined_call_operand.hbm [shape: f32[1,2048], index: 5, kind: input, shape index: {}]
  %s6 = inlined_call_operand.hbm [shape: f32[1,1], index: 6, kind: output, shape index: {}]
  %s7 = sld [smem:[#allocation0]]
  $region54: #{tpu_custom_call.1} parent=0
    _
  %s9 = ssub.s32 1, %s7
  %s10 = scalar_select 0, %s9, %s7
  %v11 = vstv %s2
  %12 = vst [vmem:[#allocation5] sm:$0x1] %v11
  $region1: #{tpu_custom_call.1} parent=0
    #allocation6 [shape = 'u8[8192]{0}', space=vmem, size = 0x2000, scoped, tag = 'input window, operand 3, single buffered']
    #allocation7 [shape = 's32[1]{0}', space=sflag, size = 0x4, scoped, tag = 'scoped memory for tpu_custom_call.1']
    #allocation8 [shape = 's32[1]{0}', space=sflag, size = 0x4, scoped, tag = 'scoped memory for tpu_custom_call.1']
    #allocation9 [shape = 'u8[8192]{0}', space=vmem, size = 0x2000, scoped, tag = 'input window, operand 4, single buffered']
    #allocation10 [shape = 's32[1]{0}', space=sflag, size = 0x4, scoped, tag = 'scoped memory for tpu_custom_call.1']
    #allocation11 [shape = 'u8[8192]{0}', space=vmem, size = 0x2000, scoped, tag = 'input window, operand 5, single buffered']
    #allocation12 [shape = 'u8[512]{0}', space=vmem, size = 0x400, scoped, tag = 'output window, operand 0, single buffered']
    %13 = vsyncpa [#allocation7], 0
    %14 = vsyncpa [#allocation10], 0
    %15 = vsyncpa [#allocation8], 0
    // Predicated region
    $region2: #{tpu_custom_call.1} parent=1 // pred_check
      _
    $region3: #{tpu_custom_call.1} parent=1 // pred_check_branch
      %17 = sbr.rel (0) target = $region5
    $region4: #{tpu_custom_call.1} parent=1 // pred_region
      _
    $region5: #{tpu_custom_call.1} parent=1 // pred_fallthru
      _
    // Predicated region
    $region6: #{tpu_custom_call.1} parent=1 // pred_check
      _
    $region7: #{tpu_custom_call.1} parent=1 // pred_check_branch
      %19 = sbr.rel (0) target = $region9
    $region8: #{tpu_custom_call.1} parent=1 // pred_region
      _
    $region9: #{tpu_custom_call.1} parent=1 // pred_fallthru
      _
    // Predicated region
    $region10: #{tpu_custom_call.1} parent=1 // pred_check
      _
    $region11: #{tpu_custom_call.1} parent=1 // pred_check_branch
      %21 = sbr.rel (0) target = $region13
    $region12: #{tpu_custom_call.1} parent=1 // pred_region
      _
    $region13: #{tpu_custom_call.1} parent=1 // pred_fallthru
      _
    // Predicated region
    $region14: #{tpu_custom_call.1} parent=1 // pred_check
      _
    $region15: #{tpu_custom_call.1} parent=1 // pred_check_branch
      %23 = sbr.rel (0) target = $region17
    $region16: #{tpu_custom_call.1} parent=1 // pred_region
      %s25 = ssub.s32 256, 256
      %26 = vsyncadd [#allocation7], %s25
      %s28 = sshll.u32 [#allocation6], 4
      %s29 = int_to_ptr.vmem [resolvable:$true] %s28
      %31 = dma.hbm_to_vmem [thread:$0]  %s3, 256, %s29, [#allocation7]
    $region17: #{tpu_custom_call.1} parent=1 // pred_fallthru
      _
    // Predicated region
    $region18: #{tpu_custom_call.1} parent=1 // pred_check
      _
    $region19: #{tpu_custom_call.1} parent=1 // pred_check_branch
      %33 = sbr.rel (0) target = $region21
    $region20: #{tpu_custom_call.1} parent=1 // pred_region
      %s35 = ssub.s32 256, 256
      %36 = vsyncadd [#allocation10], %s35
      %s38 = sshll.u32 [#allocation9], 4
      %s39 = int_to_ptr.vmem [resolvable:$true] %s38
      %41 = dma.hbm_to_vmem [thread:$0]  %s4, 256, %s39, [#allocation10]
    $region21: #{tpu_custom_call.1} parent=1 // pred_fallthru
      _
    // Predicated region
    $region22: #{tpu_custom_call.1} parent=1 // pred_check
      _
    $region23: #{tpu_custom_call.1} parent=1 // pred_check_branch
      %43 = sbr.rel (0) target = $region25
    $region24: #{tpu_custom_call.1} parent=1 // pred_region
      %s45 = ssub.s32 256, 256
      %46 = vsyncadd [#allocation10], %s45
      %s48 = sshll.u32 [#allocation11], 4
      %s49 = int_to_ptr.vmem [resolvable:$true] %s48
      %51 = dma.hbm_to_vmem [thread:$0]  %s5, 256, %s49, [#allocation10]
    $region25: #{tpu_custom_call.1} parent=1 // pred_fallthru
      _
    // Predicated region
    $region26: #{tpu_custom_call.1} parent=1 // pred_check
      _
    $region27: #{tpu_custom_call.1} parent=1 // pred_check_branch
      %53 = sbr.rel (0) target = $region29
    $region28: #{tpu_custom_call.1} parent=1 // pred_region
      %54 = dma.done [#allocation7], 256
    $region29: #{tpu_custom_call.1} parent=1 // pred_fallthru
      _
    // Predicated region
    $region30: #{tpu_custom_call.1} parent=1 // pred_check
      _
    $region31: #{tpu_custom_call.1} parent=1 // pred_check_branch
      %56 = sbr.rel (0) target = $region33
    $region32: #{tpu_custom_call.1} parent=1 // pred_region
      %57 = dma.done [#allocation10], 256
    $region33: #{tpu_custom_call.1} parent=1 // pred_fallthru
      _
    // Predicated region
    $region34: #{tpu_custom_call.1} parent=1 // pred_check
      _
    $region35: #{tpu_custom_call.1} parent=1 // pred_check_branch
      %59 = sbr.rel (0) target = $region37
    $region36: #{tpu_custom_call.1} parent=1 // pred_region
      %60 = dma.done [#allocation10], 256
    $region37: #{tpu_custom_call.1} parent=1 // pred_fallthru
      _
    %p61 = scmp.eq.s32.totalorder 0, 0
    // Predicated region
    $region38: #{tpu_custom_call.1} parent=1 // pred_check
      %p62 = pneg %p61
    $region39: #{tpu_custom_call.1} parent=1 // pred_check_branch
      %64 = sbr.rel (%p62) target = $region41
    $region40: #{tpu_custom_call.1} parent=1 // pred_region
      %65 = vst [vmem:[#allocation2] sm:$0xff] 0.0
      %66 = vst [vmem:[#allocation2 + $0x8] sm:$0xff] 0.0
      %67 = vst [vmem:[#allocation3] sm:$0xff] 0.0
      %68 = vst [vmem:[#allocation3 + $0x8] sm:$0xff] 0.0
      %69 = vst [vmem:[#allocation4] sm:$0xff] 0.0
      %70 = vst [vmem:[#allocation4 + $0x8] sm:$0xff] 0.0
    $region41: #{tpu_custom_call.1} parent=1 // pred_fallthru
      _
    %v71 = vld [vmem:[#allocation6] sm:$0xff]
    %v72 = vld [vmem:[#allocation6 + $0x8] sm:$0xff]
    %v73 = vld [vmem:[#allocation2] sm:$0xff]
    %v74 = vld [vmem:[#allocation2 + $0x8] sm:$0xff]
    %v75 = vadd.f32 %v71, 0.0
    %v76 = vadd.f32 %v72, 0.0
    %v77 = vadd.f32 %v73, %v75
    %v78 = vadd.f32 %v74, %v76
    %79 = vst [vmem:[#allocation2] sm:$0xff] %v77
    %80 = vst [vmem:[#allocation2 + $0x8] sm:$0xff] %v78
    %v81 = vld [vmem:[#allocation9] sm:$0xff]
    %v82 = vld [vmem:[#allocation9 + $0x8] sm:$0xff]
    %v83 = vld [vmem:[#allocation3] sm:$0xff]
    %v84 = vld [vmem:[#allocation3 + $0x8] sm:$0xff]
    %v85 = vadd.f32 %v81, 0.0
    %v86 = vadd.f32 %v82, 0.0
    %v87 = vadd.f32 %v83, %v85
    %v88 = vadd.f32 %v84, %v86
    %89 = vst [vmem:[#allocation3] sm:$0xff] %v87
    %90 = vst [vmem:[#allocation3 + $0x8] sm:$0xff] %v88
    %v91 = vld [vmem:[#allocation11] sm:$0xff]
    %v92 = vld [vmem:[#allocation11 + $0x8] sm:$0xff]
    %v93 = vld [vmem:[#allocation4] sm:$0xff]
    %v94 = vld [vmem:[#allocation4 + $0x8] sm:$0xff]
    %v95 = vadd.f32 %v91, 0.0
    %v96 = vadd.f32 %v92, 0.0
    %v97 = vadd.f32 %v93, %v95
    %v98 = vadd.f32 %v94, %v96
    %99 = vst [vmem:[#allocation4] sm:$0xff] %v97
    %100 = vst [vmem:[#allocation4 + $0x8] sm:$0xff] %v98
    // Predicated region
    $region42: #{tpu_custom_call.1} parent=1 // pred_check
      %p101 = pneg %p61
    $region43: #{tpu_custom_call.1} parent=1 // pred_check_branch
      %103 = sbr.rel (%p101) target = $region45
    $region44: #{tpu_custom_call.1} parent=1 // pred_region
      %v104 = vld [vmem:[%s0] sm:$0x3]
      %v105 = vld [vmem:[%s1] sm:$0x3]
      %vm106 = vcmask 58368
      %v107 = vsel %vm106, %v104, -inf
      %108 = vmax.xlane.f32.xlu0 %v107
      %v109 = vpop.xlane.xlu0 %108
      %v110 = vsub.f32 %v104, %v109
      %v111 = vmul.f32 %v110, 1.442695
      %v112 = vpow.pop %v111
      %v113 = vsel %vm106, %v112, 0.0
      %114 = vadd.xlane.f32.xlu0 %v113
      %v115 = vpop.xlane.xlu0 %114
      %v116 = vlog2.pop %v115
      %v117 = vmul.f32 %v116, 0.6931472
      %v118 = vlaneseq
      %v119 = vand.u32 %v118, 127
      %120 = vset.pattern.permute.xlu0 0
      %121 = vperm.xlu0 %120, %v105
      %v122 = vpop.permute.xlu0 %121
      %vm123 = vcmp.eq.s32.totalorder %v119, %v122
      %v124 = vsel %vm123, %v110, 0.0
      %v125 = vsel %vm106, %v124, 0.0
      %126 = vadd.xlane.f32.xlu0 %v125
      %v127 = vpop.xlane.xlu0 %126
      %v128 = vsub.f32 %v117, %v127
      %vm129 = vcmask 1041408
      %v130 = vsel %vm129, %v128, 0.0
      %v131 = vrot.slane %v130, 4
      %v132 = vadd.f32 %v130, %v131
      %v133 = vrot.slane %v132, 2
      %v134 = vadd.f32 %v132, %v133
      %v135 = vrot.slane %v134, 1
      %v136 = vadd.f32 %v134, %v135
      %v137 = vmul.f32 %v136, 0.5
      %v138 = vmul.f32 %v137, 2.0
      %v139 = vadd.f32 %v138, 0.0
      %v140 = vld [vmem:[#allocation5] sm:$0x1]
      %v141 = vsub.f32 %v139, %v140
      %v142 = vld [vmem:[#allocation2] sm:$0xff]
      %v143 = vld [vmem:[#allocation2 + $0x8] sm:$0xff]
      %v146 = vlaneseq
      %v147 = vshrl.u32 %v146, 7
      %v148 = vsub.s32 0, %v147
      %v149 = vrot.slane %v142, %v148
      %v150 = vlaneseq
      %v151 = vshrl.u32 %v150, 7
      %v152 = vsub.s32 1, %v151
      %v153 = vrot.slane %v142, %v152
      %v154 = vlaneseq
      %v155 = vshrl.u32 %v154, 7
      %v156 = vsub.s32 2, %v155
      %v157 = vrot.slane %v142, %v156
      %v158 = vlaneseq
      %v159 = vshrl.u32 %v158, 7
      %v160 = vsub.s32 3, %v159
      %v161 = vrot.slane %v142, %v160
      %v162 = vlaneseq
      %v163 = vshrl.u32 %v162, 7
      %v164 = vsub.s32 4, %v163
      %v165 = vrot.slane %v142, %v164
      %v166 = vlaneseq
      %v167 = vshrl.u32 %v166, 7
      %v168 = vsub.s32 5, %v167
      %v169 = vrot.slane %v142, %v168
      %v170 = vlaneseq
      %v171 = vshrl.u32 %v170, 7
      %v172 = vsub.s32 6, %v171
      %v173 = vrot.slane %v142, %v172
      %v174 = vlaneseq
      %v175 = vshrl.u32 %v174, 7
      %v176 = vsub.s32 7, %v175
      %v177 = vrot.slane %v142, %v176
      %v178 = vlaneseq
      %v179 = vshrl.u32 %v178, 7
      %v180 = vsub.s32 0, %v179
      %v181 = vrot.slane %v143, %v180
      %v182 = vlaneseq
      %v183 = vshrl.u32 %v182, 7
      %v184 = vsub.s32 1, %v183
      %v185 = vrot.slane %v143, %v184
      %v186 = vlaneseq
      %v187 = vshrl.u32 %v186, 7
      %v188 = vsub.s32 2, %v187
      %v189 = vrot.slane %v143, %v188
      %v190 = vlaneseq
      %v191 = vshrl.u32 %v190, 7
      %v192 = vsub.s32 3, %v191
      %v193 = vrot.slane %v143, %v192
      %v194 = vlaneseq
      %v195 = vshrl.u32 %v194, 7
      %v196 = vsub.s32 4, %v195
      %v197 = vrot.slane %v143, %v196
      %v198 = vlaneseq
      %v199 = vshrl.u32 %v198, 7
      %v200 = vsub.s32 5, %v199
      %v201 = vrot.slane %v143, %v200
      %v202 = vlaneseq
      %v203 = vshrl.u32 %v202, 7
      %v204 = vsub.s32 6, %v203
      %v205 = vrot.slane %v143, %v204
      %v206 = vlaneseq
      %v207 = vshrl.u32 %v206, 7
      %v208 = vsub.s32 7, %v207
      %v209 = vrot.slane %v143, %v208
      %vm226 = vcmask 1040384
      %v227 = vsel %vm226, %v149, 0.0
      %v228 = vsel %vm226, %v153, 0.0
      %v229 = vadd.f32 %v227, %v228
      %v230 = vsel %vm226, %v157, 0.0
      %v231 = vadd.f32 %v229, %v230
      %v232 = vsel %vm226, %v161, 0.0
      %v233 = vadd.f32 %v231, %v232
      %v234 = vsel %vm226, %v165, 0.0
      %v235 = vadd.f32 %v233, %v234
      %v236 = vsel %vm226, %v169, 0.0
      %v237 = vadd.f32 %v235, %v236
      %v238 = vsel %vm226, %v173, 0.0
      %v239 = vadd.f32 %v237, %v238
      %v240 = vsel %vm226, %v177, 0.0
      %v241 = vadd.f32 %v239, %v240
      %v242 = vsel %vm226, %v181, 0.0
      %v243 = vadd.f32 %v241, %v242
      %v244 = vsel %vm226, %v185, 0.0
      %v245 = vadd.f32 %v243, %v244
      %v246 = vsel %vm226, %v189, 0.0
      %v247 = vadd.f32 %v245, %v246
      %v248 = vsel %vm226, %v193, 0.0
      %v249 = vadd.f32 %v247, %v248
      %v250 = vsel %vm226, %v197, 0.0
      %v251 = vadd.f32 %v249, %v250
      %v252 = vsel %vm226, %v201, 0.0
      %v253 = vadd.f32 %v251, %v252
      %v254 = vsel %vm226, %v205, 0.0
      %v255 = vadd.f32 %v253, %v254
      %v256 = vsel %vm226, %v209, 0.0
      %v257 = vadd.f32 %v255, %v256
      %258 = vadd.xlane.f32.xlu0 %v257
      %v259 = vpop.xlane.xlu0 %258
      %v260 = vrot.slane %v259, 4
      %v261 = vadd.f32 %v259, %v260
      %v262 = vrot.slane %v261, 2
      %v263 = vadd.f32 %v261, %v262
      %v264 = vrot.slane %v263, 1
      %v265 = vadd.f32 %v263, %v264
      %s266 = vtos %v265
      %v267 = vstv %s266
      %v268 = vmul.f32 %v267, 0.00048828125
      %v269 = vsub.f32 1.0, %v268
      %v270 = vadd.f32 %v141, %v269
      %v271 = vld [vmem:[#allocation3] sm:$0xff]
      %v272 = vld [vmem:[#allocation3 + $0x8] sm:$0xff]
      %v275 = vlaneseq
      %v276 = vshrl.u32 %v275, 7
      %v277 = vsub.s32 0, %v276
      %v278 = vrot.slane %v271, %v277
      %v279 = vlaneseq
      %v280 = vshrl.u32 %v279, 7
      %v281 = vsub.s32 1, %v280
      %v282 = vrot.slane %v271, %v281
      %v283 = vlaneseq
      %v284 = vshrl.u32 %v283, 7
      %v285 = vsub.s32 2, %v284
      %v286 = vrot.slane %v271, %v285
      %v287 = vlaneseq
      %v288 = vshrl.u32 %v287, 7
      %v289 = vsub.s32 3, %v288
      %v290 = vrot.slane %v271, %v289
      %v291 = vlaneseq
      %v292 = vshrl.u32 %v291, 7
      %v293 = vsub.s32 4, %v292
      %v294 = vrot.slane %v271, %v293
      %v295 = vlaneseq
      %v296 = vshrl.u32 %v295, 7
      %v297 = vsub.s32 5, %v296
      %v298 = vrot.slane %v271, %v297
      %v299 = vlaneseq
      %v300 = vshrl.u32 %v299, 7
      %v301 = vsub.s32 6, %v300
      %v302 = vrot.slane %v271, %v301
      %v303 = vlaneseq
      %v304 = vshrl.u32 %v303, 7
      %v305 = vsub.s32 7, %v304
      %v306 = vrot.slane %v271, %v305
      %v307 = vlaneseq
      %v308 = vshrl.u32 %v307, 7
      %v309 = vsub.s32 0, %v308
      %v310 = vrot.slane %v272, %v309
      %v311 = vlaneseq
      %v312 = vshrl.u32 %v311, 7
      %v313 = vsub.s32 1, %v312
      %v314 = vrot.slane %v272, %v313
      %v315 = vlaneseq
      %v316 = vshrl.u32 %v315, 7
      %v317 = vsub.s32 2, %v316
      %v318 = vrot.slane %v272, %v317
      %v319 = vlaneseq
      %v320 = vshrl.u32 %v319, 7
      %v321 = vsub.s32 3, %v320
      %v322 = vrot.slane %v272, %v321
      %v323 = vlaneseq
      %v324 = vshrl.u32 %v323, 7
      %v325 = vsub.s32 4, %v324
      %v326 = vrot.slane %v272, %v325
      %v327 = vlaneseq
      %v328 = vshrl.u32 %v327, 7
      %v329 = vsub.s32 5, %v328
      %v330 = vrot.slane %v272, %v329
      %v331 = vlaneseq
      %v332 = vshrl.u32 %v331, 7
      %v333 = vsub.s32 6, %v332
      %v334 = vrot.slane %v272, %v333
      %v335 = vlaneseq
      %v336 = vshrl.u32 %v335, 7
      %v337 = vsub.s32 7, %v336
      %v338 = vrot.slane %v272, %v337
      %v355 = vsel %vm226, %v278, 0.0
      %v356 = vsel %vm226, %v282, 0.0
      %v357 = vadd.f32 %v355, %v356
      %v358 = vsel %vm226, %v286, 0.0
      %v359 = vadd.f32 %v357, %v358
      %v360 = vsel %vm226, %v290, 0.0
      %v361 = vadd.f32 %v359, %v360
      %v362 = vsel %vm226, %v294, 0.0
      %v363 = vadd.f32 %v361, %v362
      %v364 = vsel %vm226, %v298, 0.0
      %v365 = vadd.f32 %v363, %v364
      %v366 = vsel %vm226, %v302, 0.0
      %v367 = vadd.f32 %v365, %v366
      %v368 = vsel %vm226, %v306, 0.0
      %v369 = vadd.f32 %v367, %v368
      %v370 = vsel %vm226, %v310, 0.0
      %v371 = vadd.f32 %v369, %v370
      %v372 = vsel %vm226, %v314, 0.0
      %v373 = vadd.f32 %v371, %v372
      %v374 = vsel %vm226, %v318, 0.0
      %v375 = vadd.f32 %v373, %v374
      %v376 = vsel %vm226, %v322, 0.0
      %v377 = vadd.f32 %v375, %v376
      %v378 = vsel %vm226, %v326, 0.0
      %v379 = vadd.f32 %v377, %v378
      %v380 = vsel %vm226, %v330, 0.0
      %v381 = vadd.f32 %v379, %v380
      %v382 = vsel %vm226, %v334, 0.0
      %v383 = vadd.f32 %v381, %v382
      %v384 = vsel %vm226, %v338, 0.0
      %v385 = vadd.f32 %v383, %v384
      %386 = vadd.xlane.f32.xlu0 %v385
      %v387 = vpop.xlane.xlu0 %386
      %v388 = vrot.slane %v387, 4
      %v389 = vadd.f32 %v387, %v388
      %v390 = vrot.slane %v389, 2
      %v391 = vadd.f32 %v389, %v390
      %v392 = vrot.slane %v391, 1
      %v393 = vadd.f32 %v391, %v392
      %s394 = vtos %v393
      %v395 = vstv %s394
      %v396 = vmul.f32 %v395, 0.00048828125
      %v397 = vsub.f32 1.0, %v396
      %v398 = vadd.f32 %v270, %v397
      %v399 = vld [vmem:[#allocation4] sm:$0xff]
      %v400 = vld [vmem:[#allocation4 + $0x8] sm:$0xff]
      %v403 = vlaneseq
      %v404 = vshrl.u32 %v403, 7
      %v405 = vsub.s32 0, %v404
      %v406 = vrot.slane %v399, %v405
      %v407 = vlaneseq
      %v408 = vshrl.u32 %v407, 7
      %v409 = vsub.s32 1, %v408
      %v410 = vrot.slane %v399, %v409
      %v411 = vlaneseq
      %v412 = vshrl.u32 %v411, 7
      %v413 = vsub.s32 2, %v412
      %v414 = vrot.slane %v399, %v413
      %v415 = vlaneseq
      %v416 = vshrl.u32 %v415, 7
      %v417 = vsub.s32 3, %v416
      %v418 = vrot.slane %v399, %v417
      %v419 = vlaneseq
      %v420 = vshrl.u32 %v419, 7
      %v421 = vsub.s32 4, %v420
      %v422 = vrot.slane %v399, %v421
      %v423 = vlaneseq
      %v424 = vshrl.u32 %v423, 7
      %v425 = vsub.s32 5, %v424
      %v426 = vrot.slane %v399, %v425
      %v427 = vlaneseq
      %v428 = vshrl.u32 %v427, 7
      %v429 = vsub.s32 6, %v428
      %v430 = vrot.slane %v399, %v429
      %v431 = vlaneseq
      %v432 = vshrl.u32 %v431, 7
      %v433 = vsub.s32 7, %v432
      %v434 = vrot.slane %v399, %v433
      %v435 = vlaneseq
      %v436 = vshrl.u32 %v435, 7
      %v437 = vsub.s32 0, %v436
      %v438 = vrot.slane %v400, %v437
      %v439 = vlaneseq
      %v440 = vshrl.u32 %v439, 7
      %v441 = vsub.s32 1, %v440
      %v442 = vrot.slane %v400, %v441
      %v443 = vlaneseq
      %v444 = vshrl.u32 %v443, 7
      %v445 = vsub.s32 2, %v444
      %v446 = vrot.slane %v400, %v445
      %v447 = vlaneseq
      %v448 = vshrl.u32 %v447, 7
      %v449 = vsub.s32 3, %v448
      %v450 = vrot.slane %v400, %v449
      %v451 = vlaneseq
      %v452 = vshrl.u32 %v451, 7
      %v453 = vsub.s32 4, %v452
      %v454 = vrot.slane %v400, %v453
      %v455 = vlaneseq
      %v456 = vshrl.u32 %v455, 7
      %v457 = vsub.s32 5, %v456
      %v458 = vrot.slane %v400, %v457
      %v459 = vlaneseq
      %v460 = vshrl.u32 %v459, 7
      %v461 = vsub.s32 6, %v460
      %v462 = vrot.slane %v400, %v461
      %v463 = vlaneseq
      %v464 = vshrl.u32 %v463, 7
      %v465 = vsub.s32 7, %v464
      %v466 = vrot.slane %v400, %v465
      %v483 = vsel %vm226, %v406, 0.0
      %v484 = vsel %vm226, %v410, 0.0
      %v485 = vadd.f32 %v483, %v484
      %v486 = vsel %vm226, %v414, 0.0
      %v487 = vadd.f32 %v485, %v486
      %v488 = vsel %vm226, %v418, 0.0
      %v489 = vadd.f32 %v487, %v488
      %v490 = vsel %vm226, %v422, 0.0
      %v491 = vadd.f32 %v489, %v490
      %v492 = vsel %vm226, %v426, 0.0
      %v493 = vadd.f32 %v491, %v492
      %v494 = vsel %vm226, %v430, 0.0
      %v495 = vadd.f32 %v493, %v494
      %v496 = vsel %vm226, %v434, 0.0
      %v497 = vadd.f32 %v495, %v496
      %v498 = vsel %vm226, %v438, 0.0
      %v499 = vadd.f32 %v497, %v498
      %v500 = vsel %vm226, %v442, 0.0
      %v501 = vadd.f32 %v499, %v500
      %v502 = vsel %vm226, %v446, 0.0
      %v503 = vadd.f32 %v501, %v502
      %v504 = vsel %vm226, %v450, 0.0
      %v505 = vadd.f32 %v503, %v504
      %v506 = vsel %vm226, %v454, 0.0
      %v507 = vadd.f32 %v505, %v506
      %v508 = vsel %vm226, %v458, 0.0
      %v509 = vadd.f32 %v507, %v508
      %v510 = vsel %vm226, %v462, 0.0
      %v511 = vadd.f32 %v509, %v510
      %v512 = vsel %vm226, %v466, 0.0
      %v513 = vadd.f32 %v511, %v512
      %514 = vadd.xlane.f32.xlu0 %v513
      %v515 = vpop.xlane.xlu0 %514
      %v516 = vrot.slane %v515, 4
      %v517 = vadd.f32 %v515, %v516
      %v518 = vrot.slane %v517, 2
      %v519 = vadd.f32 %v517, %v518
      %v520 = vrot.slane %v519, 1
      %v521 = vadd.f32 %v519, %v520
      %s522 = vtos %v521
      %v523 = vstv %s522
      %v524 = vmul.f32 %v523, 0.00048828125
      %v525 = vsub.f32 1.0, %v524
      %v526 = vadd.f32 %v398, %v525
      %vm527 = vcmask 0
      %528 = vst.msk [vmem:[#allocation12] sm:$0x1] %vm527, %v526
    $region45: #{tpu_custom_call.1} parent=1 // pred_fallthru
      _
    // Predicated region
    $region46: #{tpu_custom_call.1} parent=1 // pred_check
      _
    $region47: #{tpu_custom_call.1} parent=1 // pred_check_branch
      %530 = sbr.rel (0) target = $region49
    $region48: #{tpu_custom_call.1} parent=1 // pred_region
      %s532 = ssub.s32 16, 16
      %533 = vsyncadd [#allocation8], %s532
      %s535 = sshll.u32 [#allocation12], 4
      %s536 = int_to_ptr.vmem [resolvable:$true] %s535
      %538 = dma.vmem_to_hbm [thread:$0]  %s536, 16, %s6, [#allocation8]
    $region49: #{tpu_custom_call.1} parent=1 // pred_fallthru
      _
    // Predicated region
    $region50: #{tpu_custom_call.1} parent=1 // pred_check
      _
    $region51: #{tpu_custom_call.1} parent=1 // pred_check_branch
      %540 = sbr.rel (0) target = $region53
    $region52: #{tpu_custom_call.1} parent=1 // pred_region
      %541 = dma.done [#allocation8], 16
    $region53: #{tpu_custom_call.1} parent=1 // pred_fallthru
      _
    %542 = vsyncpa [#allocation7], 1
    %543 = vsyncpa [#allocation10], 1
    %544 = vsyncpa [#allocation8], 1

</llo_original>
